<compile_context>
chip_gen: v7x
topology: tpu7x:2x2x1
jax: 0.10.0
libtpu: 0.0.40
codegen_flags: <defaults>
</compile_context>

<pallas_src>
import jax
import jax.numpy as jnp
from jax.experimental import pallas as pl
from jax.experimental.pallas import tpu as pltpu

_LANE = 128                 # lane alignment of the padded vocab axis
_V_CHUNK = 256              # matmul K chunk: multiple of 256 (v6e/v7x MXU K) and 128 (v5e)
_MAX_TABLE_BYTES = 8 << 20  # resident-in-VMEM table cap (fits double-buffered on all gens)


def _round_up(x, m):
    return ((x + m - 1) // m) * m


def _pick_batch_tile(B, T, target_rows=256):
    """Batch rows per grid step so bb*T ~ target_rows (fills the MXU M dim)."""
    bb = max(1, target_rows // max(T, 1))
    if bb >= B:
        return B                       # single tile: block shapes equal the full array dims
    # Multi-tile: keep the (bb, T) idx block and (bb*T, C) output block 8-sublane
    # aligned so the (8,128) tiling constraint is always satisfied.
    return max(8, (bb // 8) * 8)


def prepare_token_table(tok_emb):
    """Pad the (V, C) table once (parameter-init time), not on every forward call."""
    V, _ = tok_emb.shape
    v_pad = _round_up(V, _LANE) if V <= _V_CHUNK else _round_up(V, _V_CHUNK)
    if v_pad != V:
        tok_emb = jnp.pad(tok_emb, ((0, v_pad - V), (0, 0)))
    return tok_emb


def embedding_stem_kernel(idx_ref, tok_ref, pos_ref, out_ref):
    # idx_ref : (bb, T)     int32 — token ids for this batch tile (dense 2-D block)
    # tok_ref : (Vpad, C)   float — full, lane-aligned token-embedding table
    # pos_ref : (T, C)      float — positional embeddings, already sliced to T
    # out_ref : (bb*T, C)   float — flat, lane-dense output block
    bb, seq = idx_ref.shape
    v_pad, c = tok_ref.shape
    rows = bb * seq
    chunk = min(v_pad, _V_CHUNK)

    ids = idx_ref[...][:, :, None]                                  # (bb, T, 1)
    col = jax.lax.broadcasted_iota(jnp.int32, (1, 1, chunk), 2)     # lane-only iota

    # Accumulator starts as the broadcast positional embeddings (fused pos add,
    # no zero-fill).
    acc = jnp.tile(pos_ref[...].astype(jnp.float32), (bb, 1))       # (rows, C)

    # One-hot gather as MXU matmuls, chunked over the padded vocab axis.
    for start in range(0, v_pad, chunk):          # static loop; single iter for charnn
        one_hot = ((ids - start) == col).astype(tok_ref.dtype)      # (bb, T, chunk)
        acc = acc + jnp.dot(one_hot.reshape(rows, chunk),
                            tok_ref[start:start + chunk, :],
                            preferred_element_type=jnp.float32,
                            precision=jax.lax.Precision.HIGHEST)    # exact f32 gather

    # Dropout = identity (eval mode).
    out_ref[...] = acc.astype(out_ref.dtype)


def embedding_stem(idx, tok_emb, pos_emb):
    """idx: (B, T) int; tok_emb: (V or Vpad, C); pos_emb: (1, block_size, C) -> (B, T, C)."""
    B, T = idx.shape
    block_size = pos_emb.shape[1]
    assert T <= block_size, "Cannot forward, model block size is exhausted."

    # Fallback pad only — prefer prepare_token_table() once at init so there is
    # no per-call V*C HBM read+write.
    tok_pad = prepare_token_table(tok_emb)
    v_pad, C = tok_pad.shape

    table_bytes = v_pad * C * tok_pad.dtype.itemsize
    assert table_bytes <= _MAX_TABLE_BYTES, (
        "embedding table too large for the resident-in-VMEM design; "
        "use a scalar-prefetched row gather instead")

    pos = pos_emb[0, :T, :]                         # (T, C) == pos_emb[:, :t, :]
    idx2 = idx.astype(jnp.int32)                    # (B, T) dense 2-D block

    bb = _pick_batch_tile(B, T)
    n_tiles = -(-B // bb)                           # cdiv
    b_pad = n_tiles * bb
    if b_pad != B:                                  # pad batch so every tile is full
        idx2 = jnp.pad(idx2, ((0, b_pad - B), (0, 0)))

    rows_blk = bb * T
    out_dtype = tok_pad.dtype
    elt = tok_pad.dtype.itemsize

    # Explicit VMEM budget: double-buffered blocks + one-hot intermediate + slack,
    # capped at 64 MiB so the limit is valid on v7x as well as v5e/v6e.
    est = (2 * (table_bytes + T * C * elt + rows_blk * 4
                + rows_blk * C * jnp.dtype(out_dtype).itemsize)
           + rows_blk * min(v_pad, _V_CHUNK) * 4 + (4 << 20))
    vmem_limit = int(min(max(est, 32 << 20), 64 << 20))

    out_flat = pl.pallas_call(
        embedding_stem_kernel,
        out_shape=jax.ShapeDtypeStruct((b_pad * T, C), out_dtype),
        grid_spec=pl.GridSpec(
            grid=(n_tiles,),
            in_specs=[
                pl.BlockSpec((bb, T), lambda b: (b, 0)),        # idx batch tile
                pl.BlockSpec((v_pad, C), lambda b: (0, 0)),     # resident table (grid-invariant)
                pl.BlockSpec((T, C), lambda b: (0, 0)),         # pos slice (grid-invariant)
            ],
            out_specs=pl.BlockSpec((rows_blk, C), lambda b: (b, 0)),   # flat, lane-dense
        ),
        compiler_params=pltpu.CompilerParams(
            dimension_semantics=("parallel",),      # batch tiles shard across TCs (v7x)
            vmem_limit_bytes=vmem_limit,
        ),
    )(idx2, tok_pad, pos)

    return out_flat.reshape(b_pad, T, C)[:B]


if __name__ == "__main__":
    # GPTConfig-like small shapes: vocab_size=65 (char vocab), block_size=16, n_embd=128
    vocab_size, block_size, n_embd = 65, 16, 128
    B, T = 2, 8

    key = jax.random.PRNGKey(0)
    k_tok, k_pos, k_idx = jax.random.split(key, 3)

    # nn.Embedding(vocab_size, n_embd) weight -> (V, C).
    tok_emb = jax.random.normal(k_tok, (vocab_size, n_embd), dtype=jnp.float32)
    # nn.Parameter(torch.zeros(1, block_size, n_embd)); small random values so the
    # positional add is actually exercised by the test.
    pos_emb = 0.02 * jax.random.normal(k_pos, (1, block_size, n_embd), dtype=jnp.float32)
    idx = jax.random.randint(k_idx, (B, T), 0, vocab_size, dtype=jnp.int32)

    # Pad the table ONCE at "parameter init" time (hoisted out of the forward path).
    tok_emb_padded = jax.block_until_ready(prepare_token_table(tok_emb))

    out = embedding_stem(idx, tok_emb_padded, pos_emb)
    out = jax.block_until_ready(out)

    # pure-JAX reference (dropout = identity in eval mode)
    ref = jnp.take(tok_emb, idx, axis=0) + pos_emb[:, :T, :]

    assert out.shape == (B, T, n_embd), out.shape
    assert jnp.allclose(out, ref, atol=1e-5, rtol=1e-5), float(jnp.max(jnp.abs(out - ref)))
    print("KERNEL_OK")
</pallas_src>

<mosaic_0001>
module attributes {stable_mosaic.version = 11 : i64} {
  func.func @embedding_stem_kernel(%arg0: i32, %arg1: memref<2x8xi32, #tpu.memory_space<vmem>>, %arg2: memref<128x128xf32, #tpu.memory_space<vmem>>, %arg3: memref<8x128xf32, #tpu.memory_space<vmem>>, %arg4: memref<16x128xf32, #tpu.memory_space<vmem>>) attributes {dimension_semantics = [#tpu.dimension_semantics<parallel>], iteration_bounds = array<i64: 1>, scalar_prefetch = 0 : i64, scratch_operands = 0 : i64, tpu.core_type = #tpu.core_type<tc>, window_params = [{transform_indices = @transform_0, window_bounds = array<i64: 2, 8>}, {pipeline_mode = #tpu.pipeline_mode<synchronous>, transform_indices = @transform_1, window_bounds = array<i64: 128, 128>}, {pipeline_mode = #tpu.pipeline_mode<synchronous>, transform_indices = @transform_2, window_bounds = array<i64: 8, 128>}, {transform_indices = @transform_3, window_bounds = array<i64: 16, 128>}]} {
    %c0 = arith.constant 0 : index
    %c0_0 = arith.constant 0 : index
    %0 = vector.load %arg1[%c0, %c0_0] : memref<2x8xi32, #tpu.memory_space<vmem>>, vector<2x8xi32>
    %1 = vector.shape_cast %0 : vector<2x8xi32> to vector<2x8x1xi32>
    %2 = tpu.iota {dimensions = array<i32: 2>} : vector<1x1x128xi32>
    %c0_1 = arith.constant 0 : index
    %c0_2 = arith.constant 0 : index
    %3 = vector.load %arg3[%c0_1, %c0_2] : memref<8x128xf32, #tpu.memory_space<vmem>>, vector<8x128xf32>
    %4 = tpu.concatenate %3, %3 in 0 : vector<8x128xf32>, vector<8x128xf32> -> vector<16x128xf32>
    %c0_i32 = arith.constant 0 : i32
    %5 = vector.broadcast %c0_i32 : i32 to vector<2x8x1xi32>
    %6 = arith.subi %1, %5 : vector<2x8x1xi32>
    %7 = vector.broadcast %6 : vector<2x8x1xi32> to vector<2x8x128xi32>
    %8 = vector.broadcast %2 : vector<1x1x128xi32> to vector<2x8x128xi32>
    %9 = arith.cmpi eq, %7, %8 : vector<2x8x128xi32>
    %10 = arith.extui %9 : vector<2x8x128xi1> to vector<2x8x128xi32>
    %11 = arith.sitofp %10 : vector<2x8x128xi32> to vector<2x8x128xf32>
    %12 = vector.shape_cast %11 : vector<2x8x128xf32> to vector<16x128xf32>
    %c0_3 = arith.constant 0 : index
    %c0_4 = arith.constant 0 : index
    %13 = vector.load %arg2[%c0_3, %c0_4] : memref<128x128xf32, #tpu.memory_space<vmem>>, vector<128x128xf32>
    %cst = arith.constant dense<0.000000e+00> : vector<16x128xf32>
    %14 = tpu.matmul %12, %13, %cst {dimension_numbers = #tpu.dot_dimension_numbers<[1], [0], [0], [1], [0, 0, 1, 1], [], []>, precision = #tpu.contract_precision<fp32>} : vector<16x128xf32>, vector<128x128xf32>, vector<16x128xf32> -> vector<16x128xf32>
    %15 = arith.addf %4, %14 : vector<16x128xf32>
    %c0_5 = arith.constant 0 : index
    %c0_6 = arith.constant 0 : index
    %16 = vector.load %arg4[%c0_5, %c0_6] : memref<16x128xf32, #tpu.memory_space<vmem>>, vector<16x128xf32>
    tpu.vector_store %arg4[%c0_5, %c0_6], %15 {strides = array<i32>} : memref<16x128xf32, #tpu.memory_space<vmem>>, vector<16x128xf32>,
    return
  }
  func.func @transform_0(%arg0: i32) -> (i32, i32) {
    %c0_i32 = arith.constant 0 : i32
    %c0_i32_0 = arith.constant 0 : i32
    return %arg0, %c0_i32 : i32, i32
  }
  func.func @transform_1(%arg0: i32) -> (i32, i32) {
    %c0_i32 = arith.constant 0 : i32
    %c0_i32_0 = arith.constant 0 : i32
    %c0_i32_1 = arith.constant 0 : i32
    return %c0_i32, %c0_i32_0 : i32, i32
  }
  func.func @transform_2(%arg0: i32) -> (i32, i32) {
    %c0_i32 = arith.constant 0 : i32
    %c0_i32_0 = arith.constant 0 : i32
    %c0_i32_1 = arith.constant 0 : i32
    return %c0_i32, %c0_i32_0 : i32, i32
  }
  func.func @transform_3(%arg0: i32) -> (i32, i32) {
    %c0_i32 = arith.constant 0 : i32
    %c0_i32_0 = arith.constant 0 : i32
    return %arg0, %c0_i32 : i32, i32
  }
}

</mosaic_0001>

<llo_original>
// kernel: tpu_custom_call.1
$region0: #{tpu_custom_call.1}
  #allocation0 [shape = 'u32[]', space=smem, size = 0x4, offset = 0x4, fixed_abs, tag = 'smem constant byte address 0x4 - core index']
  #allocation1 [shape = 'u32[144,128]{1,0:T(1,128)}', space=vmem, size = 0x12000, scoped, tag = 'internal scratch']
  %s0 = inlined_call_operand.hbm [shape: s32[2,8], index: 0, kind: input, shape index: {}]
  %s1 = inlined_call_operand.hbm [shape: f32[128,128], index: 1, kind: input, shape index: {}]
  %s2 = inlined_call_operand.hbm [shape: f32[8,128], index: 2, kind: input, shape index: {}]
  %s3 = inlined_call_operand.hbm [shape: f32[16,128], index: 3, kind: output, shape index: {}]
  %s4 = sld [smem:[#allocation0]]
  $region34: #{tpu_custom_call.1} parent=0
    _
  %s6 = ssub.s32 1, %s4
  %s7 = scalar_select 0, %s6, %s4
  $region1: #{tpu_custom_call.1} parent=0
    #allocation2 [shape = 'u8[1024]{0}', space=vmem, size = 0x400, scoped, tag = 'input window, operand 0, single buffered']
    #allocation3 [shape = 's32[1]{0}', space=sflag, size = 0x4, scoped, tag = 'scoped memory for tpu_custom_call.1']
    #allocation4 [shape = 's32[1]{0}', space=sflag, size = 0x4, scoped, tag = 'scoped memory for tpu_custom_call.1']
    #allocation5 [shape = 'u8[65536]{0}', space=vmem, size = 0x10000, scoped, tag = 'input window, operand 1, single buffered']
    #allocation6 [shape = 's32[1]{0}', space=sflag, size = 0x4, scoped, tag = 'scoped memory for tpu_custom_call.1']
    #allocation7 [shape = 'u8[4096]{0}', space=vmem, size = 0x1000, scoped, tag = 'input window, operand 2, single buffered']
    #allocation8 [shape = 'u8[8192]{0}', space=vmem, size = 0x2000, scoped, tag = 'output window, operand 0, single buffered']
    %8 = vsyncpa [#allocation3], 0
    %9 = vsyncpa [#allocation6], 0
    %10 = vsyncpa [#allocation4], 0
    // Predicated region
    $region2: #{tpu_custom_call.1} parent=1 // pred_check
      _
    $region3: #{tpu_custom_call.1} parent=1 // pred_check_branch
      %12 = sbr.rel (0) target = $region5
    $region4: #{tpu_custom_call.1} parent=1 // pred_region
      %s14 = ssub.s32 32, 32
      %15 = vsyncadd [#allocation3], %s14
      %s17 = sshll.u32 [#allocation2], 4
      %s18 = int_to_ptr.vmem [resolvable:$true] %s17
      %20 = dma.hbm_to_vmem [thread:$0]  %s0, 32, %s18, [#allocation3]
    $region5: #{tpu_custom_call.1} parent=1 // pred_fallthru
      _
    // Predicated region
    $region6: #{tpu_custom_call.1} parent=1 // pred_check
      _
    $region7: #{tpu_custom_call.1} parent=1 // pred_check_branch
      %22 = sbr.rel (0) target = $region9
    $region8: #{tpu_custom_call.1} parent=1 // pred_region
      %s24 = ssub.s32 2048, 2048
      %25 = vsyncadd [#allocation6], %s24
      %s26 = sshll.u32 [#allocation5], 4
      %s27 = int_to_ptr.vmem [resolvable:$true] %s26
      %32 = dma.hbm_to_vmem [thread:$0]  %s1, 2048, %s27, [#allocation6], 128, 128, 8
    $region9: #{tpu_custom_call.1} parent=1 // pred_fallthru
      _
    // Predicated region
    $region10: #{tpu_custom_call.1} parent=1 // pred_check
      _
    $region11: #{tpu_custom_call.1} parent=1 // pred_check_branch
      %34 = sbr.rel (0) target = $region13
    $region12: #{tpu_custom_call.1} parent=1 // pred_region
      %s36 = ssub.s32 128, 128
      %37 = vsyncadd [#allocation6], %s36
      %s39 = sshll.u32 [#allocation7], 4
      %s40 = int_to_ptr.vmem [resolvable:$true] %s39
      %42 = dma.hbm_to_vmem [thread:$0]  %s2, 128, %s40, [#allocation6]
    $region13: #{tpu_custom_call.1} parent=1 // pred_fallthru
      _
    // Predicated region
    $region14: #{tpu_custom_call.1} parent=1 // pred_check
      _
    $region15: #{tpu_custom_call.1} parent=1 // pred_check_branch
      %44 = sbr.rel (0) target = $region17
    $region16: #{tpu_custom_call.1} parent=1 // pred_region
      %45 = dma.done [#allocation3], 32
    $region17: #{tpu_custom_call.1} parent=1 // pred_fallthru
      _
    // Predicated region
    $region18: #{tpu_custom_call.1} parent=1 // pred_check
      _
    $region19: #{tpu_custom_call.1} parent=1 // pred_check_branch
      %47 = sbr.rel (0) target = $region21
    $region20: #{tpu_custom_call.1} parent=1 // pred_region
      %48 = dma.done [#allocation6], 2048
    $region21: #{tpu_custom_call.1} parent=1 // pred_fallthru
      _
    // Predicated region
    $region22: #{tpu_custom_call.1} parent=1 // pred_check
      _
    $region23: #{tpu_custom_call.1} parent=1 // pred_check_branch
      %50 = sbr.rel (0) target = $region25
    $region24: #{tpu_custom_call.1} parent=1 // pred_region
      %51 = dma.done [#allocation6], 128
    $region25: #{tpu_custom_call.1} parent=1 // pred_fallthru
      _
    %v52 = vld [vmem:[#allocation2] sm:$0x3]
    %v53 = vlaneseq
    %v54 = vshrl.u32 %v53, 7
    %v55 = vsub.s32 0, %v54
    %v56 = vrot.slane %v52, %v55
    %58 = vbcast.lane.b32.xlu0 %v56, 256
    %v59 = vpop.permute.xlu0 %58
    %v60 = vlaneseq
    %v61 = vshrl.u32 %v60, 7
    %v62 = vsub.s32 1, %v61
    %v63 = vrot.slane %v52, %v62
    %65 = vbcast.lane.b32.xlu0 %v63, 256
    %v66 = vpop.permute.xlu0 %65
    %v67 = vlaneseq
    %v68 = vand.u32 %v67, 127
    %v69 = vld [vmem:[#allocation7] sm:$0xff]
    %vm70 = vcmp.eq.s32.totalorder %v59, %v68
    %vm71 = vcmp.eq.s32.totalorder %v66, %v68
    %v72 = vsel %vm70, 1, 0
    %v73 = vsel %vm71, 1, 0
    %v74 = vcvt.s32.f32 %v72
    %v75 = vcvt.s32.f32 %v73
    %v76 = vld [vmem:[#allocation5] sm:$0xff]
    %v77 = vld [vmem:[#allocation5 + $0x8] sm:$0xff]
    %v78 = vld [vmem:[#allocation5 + $0x10] sm:$0xff]
    %v79 = vld [vmem:[#allocation5 + $0x18] sm:$0xff]
    %v80 = vld [vmem:[#allocation5 + $0x20] sm:$0xff]
    %v81 = vld [vmem:[#allocation5 + $0x28] sm:$0xff]
    %v82 = vld [vmem:[#allocation5 + $0x30] sm:$0xff]
    %v83 = vld [vmem:[#allocation5 + $0x38] sm:$0xff]
    %v84 = vld [vmem:[#allocation5 + $0x40] sm:$0xff]
    %v85 = vld [vmem:[#allocation5 + $0x48] sm:$0xff]
    %v86 = vld [vmem:[#allocation5 + $0x50] sm:$0xff]
    %v87 = vld [vmem:[#allocation5 + $0x58] sm:$0xff]
    %v88 = vld [vmem:[#allocation5 + $0x60] sm:$0xff]
    %v89 = vld [vmem:[#allocation5 + $0x68] sm:$0xff]
    %v90 = vld [vmem:[#allocation5 + $0x70] sm:$0xff]
    %v91 = vld [vmem:[#allocation5 + $0x78] sm:$0xff]
    %92 = vmatprep.subr.mxu0 0.0
    %v93 = vand.u32 %v76, 4294901760
    %94 = vmatpush1.msra.mxu0 %v93
    %95 = vmatprep.subr.mxu0 0.0
    %v96 = vand.u32 %v77, 4294901760
    %97 = vmatpush1.msra.mxu0 %v96
    %98 = vmatprep.subr.mxu0 0.0
    %v99 = vand.u32 %v78, 4294901760
    %100 = vmatpush1.msra.mxu0 %v99
    %101 = vmatprep.subr.mxu0 0.0
    %v102 = vand.u32 %v79, 4294901760
    %103 = vmatpush1.msra.mxu0 %v102
    %104 = vmatprep.subr.mxu0 0.0
    %v105 = vand.u32 %v80, 4294901760
    %106 = vmatpush1.msra.mxu0 %v105
    %107 = vmatprep.subr.mxu0 0.0
    %v108 = vand.u32 %v81, 4294901760
    %109 = vmatpush1.msra.mxu0 %v108
    %110 = vmatprep.subr.mxu0 0.0
    %v111 = vand.u32 %v82, 4294901760
    %112 = vmatpush1.msra.mxu0 %v111
    %113 = vmatprep.subr.mxu0 0.0
    %v114 = vand.u32 %v83, 4294901760
    %115 = vmatpush1.msra.mxu0 %v114
    %116 = vmatprep.subr.mxu0 0.0
    %v117 = vand.u32 %v84, 4294901760
    %118 = vmatpush1.msra.mxu0 %v117
    %119 = vmatprep.subr.mxu0 0.0
    %v120 = vand.u32 %v85, 4294901760
    %121 = vmatpush1.msra.mxu0 %v120
    %122 = vmatprep.subr.mxu0 0.0
    %v123 = vand.u32 %v86, 4294901760
    %124 = vmatpush1.msra.mxu0 %v123
    %125 = vmatprep.subr.mxu0 0.0
    %v126 = vand.u32 %v87, 4294901760
    %127 = vmatpush1.msra.mxu0 %v126
    %128 = vmatprep.subr.mxu0 0.0
    %v129 = vand.u32 %v88, 4294901760
    %130 = vmatpush1.msra.mxu0 %v129
    %131 = vmatprep.subr.mxu0 0.0
    %v132 = vand.u32 %v89, 4294901760
    %133 = vmatpush1.msra.mxu0 %v132
    %134 = vmatprep.subr.mxu0 0.0
    %v135 = vand.u32 %v90, 4294901760
    %136 = vmatpush1.msra.mxu0 %v135
    %137 = vmatprep.subr.mxu0 0.0
    %v138 = vand.u32 %v91, 4294901760
    %139 = vmatpush1.msra.mxu0 %v138
    %140 = vmatprep.subr.mxu0 0.0
    %141 = vmatpush1.msra.mxu0 0.0
    %142 = vmatprep.subr.mxu0 0.0
    %143 = vmatpush1.msra.mxu0 0.0
    %144 = vmatprep.subr.mxu0 0.0
    %145 = vmatpush1.msra.mxu0 0.0
    %146 = vmatprep.subr.mxu0 0.0
    %147 = vmatpush1.msra.mxu0 0.0
    %148 = vmatprep.subr.mxu0 0.0
    %149 = vmatpush1.msra.mxu0 0.0
    %150 = vmatprep.subr.mxu0 0.0
    %151 = vmatpush1.msra.mxu0 0.0
    %152 = vmatprep.subr.mxu0 0.0
    %153 = vmatpush1.msra.mxu0 0.0
    %154 = vmatprep.subr.mxu0 0.0
    %155 = vmatpush1.msra.mxu0 0.0
    %156 = vmatprep.subr.mxu0 0.0
    %157 = vmatpush1.msra.mxu0 0.0
    %158 = vmatprep.subr.mxu0 0.0
    %159 = vmatpush1.msra.mxu0 0.0
    %160 = vmatprep.subr.mxu0 0.0
    %161 = vmatpush1.msra.mxu0 0.0
    %162 = vmatprep.subr.mxu0 0.0
    %163 = vmatpush1.msra.mxu0 0.0
    %164 = vmatprep.subr.mxu0 0.0
    %165 = vmatpush1.msra.mxu0 0.0
    %166 = vmatprep.subr.mxu0 0.0
    %167 = vmatpush1.msra.mxu0 0.0
    %168 = vmatprep.subr.mxu0 0.0
    %169 = vmatpush1.msra.mxu0 0.0
    %170 = vmatprep.subr.mxu0 0.0
    %171 = vmatpush1.msra.mxu0 0.0
    %172 = vmatprep.mubr.f32.mxu0 0.0
    %v173 = vand.u32 %v74, 4294901760
    %v174 = vsub.f32 %v74, %v173
    %v175 = vand.u32 %v174, 4294901760
    %v176 = vsub.f32 %v174, %v175
    %v177 = vand.u32 %v176, 4294901760
    %178 = vmatmul.mubr.f32.gmra.mrb[0].mxu0 %v177
    %v179 = vpop.f32.mrb[0].mxu0
    %v180 = vadd.f32 0.0, %v179
    %v181 = vpop.f32.mrb[0].mxu0
    %182 = vmatprep.mubr.f32.mxu0 0.0
    %v183 = vand.u32 %v75, 4294901760
    %v184 = vsub.f32 %v75, %v183
    %v185 = vand.u32 %v184, 4294901760
    %v186 = vsub.f32 %v184, %v185
    %v187 = vand.u32 %v186, 4294901760
    %188 = vmatmul.mubr.f32.gmra.mrb[0].mxu0 %v187
    %v189 = vpop.f32.mrb[0].mxu0
    %v190 = vadd.f32 0.0, %v189
    %v191 = vpop.f32.mrb[0].mxu0
    %192 = vdwg.mxu0
    %193 = vmatprep.subr.mxu0 0.0
    %v194 = vand.u32 %v76, 4294901760
    %v195 = vsub.f32 %v76, %v194
    %v196 = vand.u32 %v195, 4294901760
    %v197 = vsub.f32 %v195, %v196
    %v198 = vand.u32 %v197, 4294901760
    %199 = vmatpush1.msra.mxu0 %v198
    %200 = vmatprep.subr.mxu0 0.0
    %v201 = vand.u32 %v77, 4294901760
    %v202 = vsub.f32 %v77, %v201
    %v203 = vand.u32 %v202, 4294901760
    %v204 = vsub.f32 %v202, %v203
    %v205 = vand.u32 %v204, 4294901760
    %206 = vmatpush1.msra.mxu0 %v205
    %207 = vmatprep.subr.mxu0 0.0
    %v208 = vand.u32 %v78, 4294901760
    %v209 = vsub.f32 %v78, %v208
    %v210 = vand.u32 %v209, 4294901760
    %v211 = vsub.f32 %v209, %v210
    %v212 = vand.u32 %v211, 4294901760
    %213 = vmatpush1.msra.mxu0 %v212
    %214 = vmatprep.subr.mxu0 0.0
    %v215 = vand.u32 %v79, 4294901760
    %v216 = vsub.f32 %v79, %v215
    %v217 = vand.u32 %v216, 4294901760
    %v218 = vsub.f32 %v216, %v217
    %v219 = vand.u32 %v218, 4294901760
    %220 = vmatpush1.msra.mxu0 %v219
    %221 = vmatprep.subr.mxu0 0.0
    %v222 = vand.u32 %v80, 4294901760
    %v223 = vsub.f32 %v80, %v222
    %v224 = vand.u32 %v223, 4294901760
    %v225 = vsub.f32 %v223, %v224
    %v226 = vand.u32 %v225, 4294901760
    %227 = vmatpush1.msra.mxu0 %v226
    %228 = vmatprep.subr.mxu0 0.0
    %v229 = vand.u32 %v81, 4294901760
    %v230 = vsub.f32 %v81, %v229
    %v231 = vand.u32 %v230, 4294901760
    %v232 = vsub.f32 %v230, %v231
    %v233 = vand.u32 %v232, 4294901760
    %234 = vmatpush1.msra.mxu0 %v233
    %235 = vmatprep.subr.mxu0 0.0
    %v236 = vand.u32 %v82, 4294901760
    %v237 = vsub.f32 %v82, %v236
    %v238 = vand.u32 %v237, 4294901760
    %v239 = vsub.f32 %v237, %v238
    %v240 = vand.u32 %v239, 4294901760
    %241 = vmatpush1.msra.mxu0 %v240
    %242 = vmatprep.subr.mxu0 0.0
    %v243 = vand.u32 %v83, 4294901760
    %v244 = vsub.f32 %v83, %v243
    %v245 = vand.u32 %v244, 4294901760
    %v246 = vsub.f32 %v244, %v245
    %v247 = vand.u32 %v246, 4294901760
    %248 = vmatpush1.msra.mxu0 %v247
    %249 = vmatprep.subr.mxu0 0.0
    %v250 = vand.u32 %v84, 4294901760
    %v251 = vsub.f32 %v84, %v250
    %v252 = vand.u32 %v251, 4294901760
    %v253 = vsub.f32 %v251, %v252
    %v254 = vand.u32 %v253, 4294901760
    %255 = vmatpush1.msra.mxu0 %v254
    %256 = vmatprep.subr.mxu0 0.0
    %v257 = vand.u32 %v85, 4294901760
    %v258 = vsub.f32 %v85, %v257
    %v259 = vand.u32 %v258, 4294901760
    %v260 = vsub.f32 %v258, %v259
    %v261 = vand.u32 %v260, 4294901760
    %262 = vmatpush1.msra.mxu0 %v261
    %263 = vmatprep.subr.mxu0 0.0
    %v264 = vand.u32 %v86, 4294901760
    %v265 = vsub.f32 %v86, %v264
    %v266 = vand.u32 %v265, 4294901760
    %v267 = vsub.f32 %v265, %v266
    %v268 = vand.u32 %v267, 4294901760
    %269 = vmatpush1.msra.mxu0 %v268
    %270 = vmatprep.subr.mxu0 0.0
    %v271 = vand.u32 %v87, 4294901760
    %v272 = vsub.f32 %v87, %v271
    %v273 = vand.u32 %v272, 4294901760
    %v274 = vsub.f32 %v272, %v273
    %v275 = vand.u32 %v274, 4294901760
    %276 = vmatpush1.msra.mxu0 %v275
    %277 = vmatprep.subr.mxu0 0.0
    %v278 = vand.u32 %v88, 4294901760
    %v279 = vsub.f32 %v88, %v278
    %v280 = vand.u32 %v279, 4294901760
    %v281 = vsub.f32 %v279, %v280
    %v282 = vand.u32 %v281, 4294901760
    %283 = vmatpush1.msra.mxu0 %v282
    %284 = vmatprep.subr.mxu0 0.0
    %v285 = vand.u32 %v89, 4294901760
    %v286 = vsub.f32 %v89, %v285
    %v287 = vand.u32 %v286, 4294901760
    %v288 = vsub.f32 %v286, %v287
    %v289 = vand.u32 %v288, 4294901760
    %290 = vmatpush1.msra.mxu0 %v289
    %291 = vmatprep.subr.mxu0 0.0
    %v292 = vand.u32 %v90, 4294901760
    %v293 = vsub.f32 %v90, %v292
    %v294 = vand.u32 %v293, 4294901760
    %v295 = vsub.f32 %v293, %v294
    %v296 = vand.u32 %v295, 4294901760
    %297 = vmatpush1.msra.mxu0 %v296
    %298 = vmatprep.subr.mxu0 0.0
    %v299 = vand.u32 %v91, 4294901760
    %v300 = vsub.f32 %v91, %v299
    %v301 = vand.u32 %v300, 4294901760
    %v302 = vsub.f32 %v300, %v301
    %v303 = vand.u32 %v302, 4294901760
    %304 = vmatpush1.msra.mxu0 %v303
    %305 = vmatprep.subr.mxu0 0.0
    %306 = vmatpush1.msra.mxu0 0.0
    %307 = vmatprep.subr.mxu0 0.0
    %308 = vmatpush1.msra.mxu0 0.0
    %309 = vmatprep.subr.mxu0 0.0
    %310 = vmatpush1.msra.mxu0 0.0
    %311 = vmatprep.subr.mxu0 0.0
    %312 = vmatpush1.msra.mxu0 0.0
    %313 = vmatprep.subr.mxu0 0.0
    %314 = vmatpush1.msra.mxu0 0.0
    %315 = vmatprep.subr.mxu0 0.0
    %316 = vmatpush1.msra.mxu0 0.0
    %317 = vmatprep.subr.mxu0 0.0
    %318 = vmatpush1.msra.mxu0 0.0
    %319 = vmatprep.subr.mxu0 0.0
    %320 = vmatpush1.msra.mxu0 0.0
    %321 = vmatprep.subr.mxu0 0.0
    %322 = vmatpush1.msra.mxu0 0.0
    %323 = vmatprep.subr.mxu0 0.0
    %324 = vmatpush1.msra.mxu0 0.0
    %325 = vmatprep.subr.mxu0 0.0
    %326 = vmatpush1.msra.mxu0 0.0
    %327 = vmatprep.subr.mxu0 0.0
    %328 = vmatpush1.msra.mxu0 0.0
    %329 = vmatprep.subr.mxu0 0.0
    %330 = vmatpush1.msra.mxu0 0.0
    %331 = vmatprep.subr.mxu0 0.0
    %332 = vmatpush1.msra.mxu0 0.0
    %333 = vmatprep.subr.mxu0 0.0
    %334 = vmatpush1.msra.mxu0 0.0
    %335 = vmatprep.subr.mxu0 0.0
    %336 = vmatpush1.msra.mxu0 0.0
    %337 = vmatprep.mubr.f32.mxu0 0.0
    %v338 = vand.u32 %v74, 4294901760
    %339 = vmatmul.mubr.f32.gmra.mrb[0].mxu0 %v338
    %v340 = vpop.f32.mrb[0].mxu0
    %v341 = vadd.f32 %v180, %v340
    %v342 = vpop.f32.mrb[0].mxu0
    %343 = vmatprep.mubr.f32.mxu0 0.0
    %v344 = vand.u32 %v75, 4294901760
    %345 = vmatmul.mubr.f32.gmra.mrb[0].mxu0 %v344
    %v346 = vpop.f32.mrb[0].mxu0
    %v347 = vadd.f32 %v190, %v346
    %v348 = vpop.f32.mrb[0].mxu0
    %349 = vdwg.mxu0
    %350 = vmatprep.subr.mxu0 0.0
    %v351 = vand.u32 %v76, 4294901760
    %v352 = vsub.f32 %v76, %v351
    %353 = vmatpush1.msra.mxu0 %v352
    %354 = vmatprep.subr.mxu0 0.0
    %v355 = vand.u32 %v77, 4294901760
    %v356 = vsub.f32 %v77, %v355
    %357 = vmatpush1.msra.mxu0 %v356
    %358 = vmatprep.subr.mxu0 0.0
    %v359 = vand.u32 %v78, 4294901760
    %v360 = vsub.f32 %v78, %v359
    %361 = vmatpush1.msra.mxu0 %v360
    %362 = vmatprep.subr.mxu0 0.0
    %v363 = vand.u32 %v79, 4294901760
    %v364 = vsub.f32 %v79, %v363
    %365 = vmatpush1.msra.mxu0 %v364
    %366 = vmatprep.subr.mxu0 0.0
    %v367 = vand.u32 %v80, 4294901760
    %v368 = vsub.f32 %v80, %v367
    %369 = vmatpush1.msra.mxu0 %v368
    %370 = vmatprep.subr.mxu0 0.0
    %v371 = vand.u32 %v81, 4294901760
    %v372 = vsub.f32 %v81, %v371
    %373 = vmatpush1.msra.mxu0 %v372
    %374 = vmatprep.subr.mxu0 0.0
    %v375 = vand.u32 %v82, 4294901760
    %v376 = vsub.f32 %v82, %v375
    %377 = vmatpush1.msra.mxu0 %v376
    %378 = vmatprep.subr.mxu0 0.0
    %v379 = vand.u32 %v83, 4294901760
    %v380 = vsub.f32 %v83, %v379
    %381 = vmatpush1.msra.mxu0 %v380
    %382 = vmatprep.subr.mxu0 0.0
    %v383 = vand.u32 %v84, 4294901760
    %v384 = vsub.f32 %v84, %v383
    %385 = vmatpush1.msra.mxu0 %v384
    %386 = vmatprep.subr.mxu0 0.0
    %v387 = vand.u32 %v85, 4294901760
    %v388 = vsub.f32 %v85, %v387
    %389 = vmatpush1.msra.mxu0 %v388
    %390 = vmatprep.subr.mxu0 0.0
    %v391 = vand.u32 %v86, 4294901760
    %v392 = vsub.f32 %v86, %v391
    %393 = vmatpush1.msra.mxu0 %v392
    %394 = vmatprep.subr.mxu0 0.0
    %v395 = vand.u32 %v87, 4294901760
    %v396 = vsub.f32 %v87, %v395
    %397 = vmatpush1.msra.mxu0 %v396
    %398 = vmatprep.subr.mxu0 0.0
    %v399 = vand.u32 %v88, 4294901760
    %v400 = vsub.f32 %v88, %v399
    %401 = vmatpush1.msra.mxu0 %v400
    %402 = vmatprep.subr.mxu0 0.0
    %v403 = vand.u32 %v89, 4294901760
    %v404 = vsub.f32 %v89, %v403
    %405 = vmatpush1.msra.mxu0 %v404
    %406 = vmatprep.subr.mxu0 0.0
    %v407 = vand.u32 %v90, 4294901760
    %v408 = vsub.f32 %v90, %v407
    %409 = vmatpush1.msra.mxu0 %v408
    %410 = vmatprep.subr.mxu0 0.0
    %v411 = vand.u32 %v91, 4294901760
    %v412 = vsub.f32 %v91, %v411
    %413 = vmatpush1.msra.mxu0 %v412
    %414 = vmatprep.subr.mxu0 0.0
    %415 = vmatpush1.msra.mxu0 0.0
    %416 = vmatprep.subr.mxu0 0.0
    %417 = vmatpush1.msra.mxu0 0.0
    %418 = vmatprep.subr.mxu0 0.0
    %419 = vmatpush1.msra.mxu0 0.0
    %420 = vmatprep.subr.mxu0 0.0
    %421 = vmatpush1.msra.mxu0 0.0
    %422 = vmatprep.subr.mxu0 0.0
    %423 = vmatpush1.msra.mxu0 0.0
    %424 = vmatprep.subr.mxu0 0.0
    %425 = vmatpush1.msra.mxu0 0.0
    %426 = vmatprep.subr.mxu0 0.0
    %427 = vmatpush1.msra.mxu0 0.0
    %428 = vmatprep.subr.mxu0 0.0
    %429 = vmatpush1.msra.mxu0 0.0
    %430 = vmatprep.subr.mxu0 0.0
    %431 = vmatpush1.msra.mxu0 0.0
    %432 = vmatprep.subr.mxu0 0.0
    %433 = vmatpush1.msra.mxu0 0.0
    %434 = vmatprep.subr.mxu0 0.0
    %435 = vmatpush1.msra.mxu0 0.0
    %436 = vmatprep.subr.mxu0 0.0
    %437 = vmatpush1.msra.mxu0 0.0
    %438 = vmatprep.subr.mxu0 0.0
    %439 = vmatpush1.msra.mxu0 0.0
    %440 = vmatprep.subr.mxu0 0.0
    %441 = vmatpush1.msra.mxu0 0.0
    %442 = vmatprep.subr.mxu0 0.0
    %443 = vmatpush1.msra.mxu0 0.0
    %444 = vmatprep.subr.mxu0 0.0
    %445 = vmatpush1.msra.mxu0 0.0
    %446 = vmatprep.mubr.f32.mxu0 0.0
    %v447 = vand.u32 %v74, 4294901760
    %v448 = vsub.f32 %v74, %v447
    %449 = vmatmul.mubr.f32.gmra.mrb[0].mxu0 %v448
    %v450 = vpop.f32.mrb[0].mxu0
    %v451 = vadd.f32 %v341, %v450
    %v452 = vpop.f32.mrb[0].mxu0
    %453 = vmatprep.mubr.f32.mxu0 0.0
    %v454 = vand.u32 %v75, 4294901760
    %v455 = vsub.f32 %v75, %v454
    %456 = vmatmul.mubr.f32.gmra.mrb[0].mxu0 %v455
    %v457 = vpop.f32.mrb[0].mxu0
    %v458 = vadd.f32 %v347, %v457
    %v459 = vpop.f32.mrb[0].mxu0
    %460 = vdwg.mxu0
    %461 = vmatprep.subr.mxu0 0.0
    %v462 = vand.u32 %v76, 4294901760
    %463 = vmatpush1.msra.mxu0 %v462
    %464 = vmatprep.subr.mxu0 0.0
    %v465 = vand.u32 %v77, 4294901760
    %466 = vmatpush1.msra.mxu0 %v465
    %467 = vmatprep.subr.mxu0 0.0
    %v468 = vand.u32 %v78, 4294901760
    %469 = vmatpush1.msra.mxu0 %v468
    %470 = vmatprep.subr.mxu0 0.0
    %v471 = vand.u32 %v79, 4294901760
    %472 = vmatpush1.msra.mxu0 %v471
    %473 = vmatprep.subr.mxu0 0.0
    %v474 = vand.u32 %v80, 4294901760
    %475 = vmatpush1.msra.mxu0 %v474
    %476 = vmatprep.subr.mxu0 0.0
    %v477 = vand.u32 %v81, 4294901760
    %478 = vmatpush1.msra.mxu0 %v477
    %479 = vmatprep.subr.mxu0 0.0
    %v480 = vand.u32 %v82, 4294901760
    %481 = vmatpush1.msra.mxu0 %v480
    %482 = vmatprep.subr.mxu0 0.0
    %v483 = vand.u32 %v83, 4294901760
    %484 = vmatpush1.msra.mxu0 %v483
    %485 = vmatprep.subr.mxu0 0.0
    %v486 = vand.u32 %v84, 4294901760
    %487 = vmatpush1.msra.mxu0 %v486
    %488 = vmatprep.subr.mxu0 0.0
    %v489 = vand.u32 %v85, 4294901760
    %490 = vmatpush1.msra.mxu0 %v489
    %491 = vmatprep.subr.mxu0 0.0
    %v492 = vand.u32 %v86, 4294901760
    %493 = vmatpush1.msra.mxu0 %v492
    %494 = vmatprep.subr.mxu0 0.0
    %v495 = vand.u32 %v87, 4294901760
    %496 = vmatpush1.msra.mxu0 %v495
    %497 = vmatprep.subr.mxu0 0.0
    %v498 = vand.u32 %v88, 4294901760
    %499 = vmatpush1.msra.mxu0 %v498
    %500 = vmatprep.subr.mxu0 0.0
    %v501 = vand.u32 %v89, 4294901760
    %502 = vmatpush1.msra.mxu0 %v501
    %503 = vmatprep.subr.mxu0 0.0
    %v504 = vand.u32 %v90, 4294901760
    %505 = vmatpush1.msra.mxu0 %v504
    %506 = vmatprep.subr.mxu0 0.0
    %v507 = vand.u32 %v91, 4294901760
    %508 = vmatpush1.msra.mxu0 %v507
    %509 = vmatprep.subr.mxu0 0.0
    %510 = vmatpush1.msra.mxu0 0.0
    %511 = vmatprep.subr.mxu0 0.0
    %512 = vmatpush1.msra.mxu0 0.0
    %513 = vmatprep.subr.mxu0 0.0
    %514 = vmatpush1.msra.mxu0 0.0
    %515 = vmatprep.subr.mxu0 0.0
    %516 = vmatpush1.msra.mxu0 0.0
    %517 = vmatprep.subr.mxu0 0.0
    %518 = vmatpush1.msra.mxu0 0.0
    %519 = vmatprep.subr.mxu0 0.0
    %520 = vmatpush1.msra.mxu0 0.0
    %521 = vmatprep.subr.mxu0 0.0
    %522 = vmatpush1.msra.mxu0 0.0
    %523 = vmatprep.subr.mxu0 0.0
    %524 = vmatpush1.msra.mxu0 0.0
    %525 = vmatprep.subr.mxu0 0.0
    %526 = vmatpush1.msra.mxu0 0.0
    %527 = vmatprep.subr.mxu0 0.0
    %528 = vmatpush1.msra.mxu0 0.0
    %529 = vmatprep.subr.mxu0 0.0
    %530 = vmatpush1.msra.mxu0 0.0
    %531 = vmatprep.subr.mxu0 0.0
    %532 = vmatpush1.msra.mxu0 0.0
    %533 = vmatprep.subr.mxu0 0.0
    %534 = vmatpush1.msra.mxu0 0.0
    %535 = vmatprep.subr.mxu0 0.0
    %536 = vmatpush1.msra.mxu0 0.0
    %537 = vmatprep.subr.mxu0 0.0
    %538 = vmatpush1.msra.mxu0 0.0
    %539 = vmatprep.subr.mxu0 0.0
    %540 = vmatpush1.msra.mxu0 0.0
    %541 = vmatprep.mubr.f32.mxu0 0.0
    %v542 = vand.u32 %v74, 4294901760
    %v543 = vsub.f32 %v74, %v542
    %v544 = vand.u32 %v543, 4294901760
    %545 = vmatmul.mubr.f32.gmra.mrb[0].mxu0 %v544
    %v546 = vpop.f32.mrb[0].mxu0
    %v547 = vadd.f32 %v451, %v546
    %v548 = vpop.f32.mrb[0].mxu0
    %549 = vmatprep.mubr.f32.mxu0 0.0
    %v550 = vand.u32 %v75, 4294901760
    %v551 = vsub.f32 %v75, %v550
    %v552 = vand.u32 %v551, 4294901760
    %553 = vmatmul.mubr.f32.gmra.mrb[0].mxu0 %v552
    %v554 = vpop.f32.mrb[0].mxu0
    %v555 = vadd.f32 %v458, %v554
    %v556 = vpop.f32.mrb[0].mxu0
    %557 = vdwg.mxu0
    %558 = vmatprep.subr.mxu0 0.0
    %v559 = vand.u32 %v76, 4294901760
    %v560 = vsub.f32 %v76, %v559
    %v561 = vand.u32 %v560, 4294901760
    %562 = vmatpush1.msra.mxu0 %v561
    %563 = vmatprep.subr.mxu0 0.0
    %v564 = vand.u32 %v77, 4294901760
    %v565 = vsub.f32 %v77, %v564
    %v566 = vand.u32 %v565, 4294901760
    %567 = vmatpush1.msra.mxu0 %v566
    %568 = vmatprep.subr.mxu0 0.0
    %v569 = vand.u32 %v78, 4294901760
    %v570 = vsub.f32 %v78, %v569
    %v571 = vand.u32 %v570, 4294901760
    %572 = vmatpush1.msra.mxu0 %v571
    %573 = vmatprep.subr.mxu0 0.0
    %v574 = vand.u32 %v79, 4294901760
    %v575 = vsub.f32 %v79, %v574
    %v576 = vand.u32 %v575, 4294901760
    %577 = vmatpush1.msra.mxu0 %v576
    %578 = vmatprep.subr.mxu0 0.0
    %v579 = vand.u32 %v80, 4294901760
    %v580 = vsub.f32 %v80, %v579
    %v581 = vand.u32 %v580, 4294901760
    %582 = vmatpush1.msra.mxu0 %v581
    %583 = vmatprep.subr.mxu0 0.0
    %v584 = vand.u32 %v81, 4294901760
    %v585 = vsub.f32 %v81, %v584
    %v586 = vand.u32 %v585, 4294901760
    %587 = vmatpush1.msra.mxu0 %v586
    %588 = vmatprep.subr.mxu0 0.0
    %v589 = vand.u32 %v82, 4294901760
    %v590 = vsub.f32 %v82, %v589
    %v591 = vand.u32 %v590, 4294901760
    %592 = vmatpush1.msra.mxu0 %v591
    %593 = vmatprep.subr.mxu0 0.0
    %v594 = vand.u32 %v83, 4294901760
    %v595 = vsub.f32 %v83, %v594
    %v596 = vand.u32 %v595, 4294901760
    %597 = vmatpush1.msra.mxu0 %v596
    %598 = vmatprep.subr.mxu0 0.0
    %v599 = vand.u32 %v84, 4294901760
    %v600 = vsub.f32 %v84, %v599
    %v601 = vand.u32 %v600, 4294901760
    %602 = vmatpush1.msra.mxu0 %v601
    %603 = vmatprep.subr.mxu0 0.0
    %v604 = vand.u32 %v85, 4294901760
    %v605 = vsub.f32 %v85, %v604
    %v606 = vand.u32 %v605, 4294901760
    %607 = vmatpush1.msra.mxu0 %v606
    %608 = vmatprep.subr.mxu0 0.0
    %v609 = vand.u32 %v86, 4294901760
    %v610 = vsub.f32 %v86, %v609
    %v611 = vand.u32 %v610, 4294901760
    %612 = vmatpush1.msra.mxu0 %v611
    %613 = vmatprep.subr.mxu0 0.0
    %v614 = vand.u32 %v87, 4294901760
    %v615 = vsub.f32 %v87, %v614
    %v616 = vand.u32 %v615, 4294901760
    %617 = vmatpush1.msra.mxu0 %v616
    %618 = vmatprep.subr.mxu0 0.0
    %v619 = vand.u32 %v88, 4294901760
    %v620 = vsub.f32 %v88, %v619
    %v621 = vand.u32 %v620, 4294901760
    %622 = vmatpush1.msra.mxu0 %v621
    %623 = vmatprep.subr.mxu0 0.0
    %v624 = vand.u32 %v89, 4294901760
    %v625 = vsub.f32 %v89, %v624
    %v626 = vand.u32 %v625, 4294901760
    %627 = vmatpush1.msra.mxu0 %v626
    %628 = vmatprep.subr.mxu0 0.0
    %v629 = vand.u32 %v90, 4294901760
    %v630 = vsub.f32 %v90, %v629
    %v631 = vand.u32 %v630, 4294901760
    %632 = vmatpush1.msra.mxu0 %v631
    %633 = vmatprep.subr.mxu0 0.0
    %v634 = vand.u32 %v91, 4294901760
    %v635 = vsub.f32 %v91, %v634
    %v636 = vand.u32 %v635, 4294901760
    %637 = vmatpush1.msra.mxu0 %v636
    %638 = vmatprep.subr.mxu0 0.0
    %639 = vmatpush1.msra.mxu0 0.0
    %640 = vmatprep.subr.mxu0 0.0
    %641 = vmatpush1.msra.mxu0 0.0
    %642 = vmatprep.subr.mxu0 0.0
    %643 = vmatpush1.msra.mxu0 0.0
    %644 = vmatprep.subr.mxu0 0.0
    %645 = vmatpush1.msra.mxu0 0.0
    %646 = vmatprep.subr.mxu0 0.0
    %647 = vmatpush1.msra.mxu0 0.0
    %648 = vmatprep.subr.mxu0 0.0
    %649 = vmatpush1.msra.mxu0 0.0
    %650 = vmatprep.subr.mxu0 0.0
    %651 = vmatpush1.msra.mxu0 0.0
    %652 = vmatprep.subr.mxu0 0.0
    %653 = vmatpush1.msra.mxu0 0.0
    %654 = vmatprep.subr.mxu0 0.0
    %655 = vmatpush1.msra.mxu0 0.0
    %656 = vmatprep.subr.mxu0 0.0
    %657 = vmatpush1.msra.mxu0 0.0
    %658 = vmatprep.subr.mxu0 0.0
    %659 = vmatpush1.msra.mxu0 0.0
    %660 = vmatprep.subr.mxu0 0.0
    %661 = vmatpush1.msra.mxu0 0.0
    %662 = vmatprep.subr.mxu0 0.0
    %663 = vmatpush1.msra.mxu0 0.0
    %664 = vmatprep.subr.mxu0 0.0
    %665 = vmatpush1.msra.mxu0 0.0
    %666 = vmatprep.subr.mxu0 0.0
    %667 = vmatpush1.msra.mxu0 0.0
    %668 = vmatprep.subr.mxu0 0.0
    %669 = vmatpush1.msra.mxu0 0.0
    %670 = vmatprep.mubr.f32.mxu0 0.0
    %v671 = vand.u32 %v74, 4294901760
    %672 = vmatmul.mubr.f32.gmra.mrb[0].mxu0 %v671
    %v673 = vpop.f32.mrb[0].mxu0
    %v674 = vadd.f32 %v547, %v673
    %v675 = vpop.f32.mrb[0].mxu0
    %676 = vmatprep.mubr.f32.mxu0 0.0
    %v677 = vand.u32 %v75, 4294901760
    %678 = vmatmul.mubr.f32.gmra.mrb[0].mxu0 %v677
    %v679 = vpop.f32.mrb[0].mxu0
    %v680 = vadd.f32 %v555, %v679
    %v681 = vpop.f32.mrb[0].mxu0
    %682 = vdwg.mxu0
    %683 = vmatprep.subr.mxu0 0.0
    %v684 = vand.u32 %v76, 4294901760
    %685 = vmatpush1.msra.mxu0 %v684
    %686 = vmatprep.subr.mxu0 0.0
    %v687 = vand.u32 %v77, 4294901760
    %688 = vmatpush1.msra.mxu0 %v687
    %689 = vmatprep.subr.mxu0 0.0
    %v690 = vand.u32 %v78, 4294901760
    %691 = vmatpush1.msra.mxu0 %v690
    %692 = vmatprep.subr.mxu0 0.0
    %v693 = vand.u32 %v79, 4294901760
    %694 = vmatpush1.msra.mxu0 %v693
    %695 = vmatprep.subr.mxu0 0.0
    %v696 = vand.u32 %v80, 4294901760
    %697 = vmatpush1.msra.mxu0 %v696
    %698 = vmatprep.subr.mxu0 0.0
    %v699 = vand.u32 %v81, 4294901760
    %700 = vmatpush1.msra.mxu0 %v699
    %701 = vmatprep.subr.mxu0 0.0
    %v702 = vand.u32 %v82, 4294901760
    %703 = vmatpush1.msra.mxu0 %v702
    %704 = vmatprep.subr.mxu0 0.0
    %v705 = vand.u32 %v83, 4294901760
    %706 = vmatpush1.msra.mxu0 %v705
    %707 = vmatprep.subr.mxu0 0.0
    %v708 = vand.u32 %v84, 4294901760
    %709 = vmatpush1.msra.mxu0 %v708
    %710 = vmatprep.subr.mxu0 0.0
    %v711 = vand.u32 %v85, 4294901760
    %712 = vmatpush1.msra.mxu0 %v711
    %713 = vmatprep.subr.mxu0 0.0
    %v714 = vand.u32 %v86, 4294901760
    %715 = vmatpush1.msra.mxu0 %v714
    %716 = vmatprep.subr.mxu0 0.0
    %v717 = vand.u32 %v87, 4294901760
    %718 = vmatpush1.msra.mxu0 %v717
    %719 = vmatprep.subr.mxu0 0.0
    %v720 = vand.u32 %v88, 4294901760
    %721 = vmatpush1.msra.mxu0 %v720
    %722 = vmatprep.subr.mxu0 0.0
    %v723 = vand.u32 %v89, 4294901760
    %724 = vmatpush1.msra.mxu0 %v723
    %725 = vmatprep.subr.mxu0 0.0
    %v726 = vand.u32 %v90, 4294901760
    %727 = vmatpush1.msra.mxu0 %v726
    %728 = vmatprep.subr.mxu0 0.0
    %v729 = vand.u32 %v91, 4294901760
    %730 = vmatpush1.msra.mxu0 %v729
    %731 = vmatprep.subr.mxu0 0.0
    %732 = vmatpush1.msra.mxu0 0.0
    %733 = vmatprep.subr.mxu0 0.0
    %734 = vmatpush1.msra.mxu0 0.0
    %735 = vmatprep.subr.mxu0 0.0
    %736 = vmatpush1.msra.mxu0 0.0
    %737 = vmatprep.subr.mxu0 0.0
    %738 = vmatpush1.msra.mxu0 0.0
    %739 = vmatprep.subr.mxu0 0.0
    %740 = vmatpush1.msra.mxu0 0.0
    %741 = vmatprep.subr.mxu0 0.0
    %742 = vmatpush1.msra.mxu0 0.0
    %743 = vmatprep.subr.mxu0 0.0
    %744 = vmatpush1.msra.mxu0 0.0
    %745 = vmatprep.subr.mxu0 0.0
    %746 = vmatpush1.msra.mxu0 0.0
    %747 = vmatprep.subr.mxu0 0.0
    %748 = vmatpush1.msra.mxu0 0.0
    %749 = vmatprep.subr.mxu0 0.0
    %750 = vmatpush1.msra.mxu0 0.0
    %751 = vmatprep.subr.mxu0 0.0
    %752 = vmatpush1.msra.mxu0 0.0
    %753 = vmatprep.subr.mxu0 0.0
    %754 = vmatpush1.msra.mxu0 0.0
    %755 = vmatprep.subr.mxu0 0.0
    %756 = vmatpush1.msra.mxu0 0.0
    %757 = vmatprep.subr.mxu0 0.0
    %758 = vmatpush1.msra.mxu0 0.0
    %759 = vmatprep.subr.mxu0 0.0
    %760 = vmatpush1.msra.mxu0 0.0
    %761 = vmatprep.subr.mxu0 0.0
    %762 = vmatpush1.msra.mxu0 0.0
    %763 = vmatprep.mubr.f32.mxu0 0.0
    %v764 = vand.u32 %v74, 4294901760
    %765 = vmatmul.mubr.f32.gmra.mrb[0].mxu0 %v764
    %v766 = vpop.f32.mrb[0].mxu0
    %v767 = vadd.f32 %v674, %v766
    %v768 = vpop.f32.mrb[0].mxu0
    %769 = vmatprep.mubr.f32.mxu0 0.0
    %v770 = vand.u32 %v75, 4294901760
    %771 = vmatmul.mubr.f32.gmra.mrb[0].mxu0 %v770
    %v772 = vpop.f32.mrb[0].mxu0
    %v773 = vadd.f32 %v680, %v772
    %v774 = vpop.f32.mrb[0].mxu0
    %775 = vdwg.mxu0
    %v776 = vadd.f32 %v69, %v767
    %v777 = vadd.f32 %v69, %v773
    %778 = vst [vmem:[#allocation8] sm:$0xff] %v776
    %779 = vst [vmem:[#allocation8 + $0x8] sm:$0xff] %v777
    // Predicated region
    $region26: #{tpu_custom_call.1} parent=1 // pred_check
      _
    $region27: #{tpu_custom_call.1} parent=1 // pred_check_branch
      %781 = sbr.rel (0) target = $region29
    $region28: #{tpu_custom_call.1} parent=1 // pred_region
      %s783 = ssub.s32 256, 256
      %784 = vsyncadd [#allocation4], %s783
      %s785 = sshll.u32 [#allocation8], 4
      %s786 = int_to_ptr.vmem [resolvable:$true] %s785
      %791 = dma.vmem_to_hbm [thread:$0]  %s786, 256, %s3, [#allocation4], 128, 128, 8
    $region29: #{tpu_custom_call.1} parent=1 // pred_fallthru
      _
    // Predicated region
    $region30: #{tpu_custom_call.1} parent=1 // pred_check
      _
    $region31: #{tpu_custom_call.1} parent=1 // pred_check_branch
      %793 = sbr.rel (0) target = $region33
    $region32: #{tpu_custom_call.1} parent=1 // pred_region
      %794 = dma.done [#allocation4], 256
    $region33: #{tpu_custom_call.1} parent=1 // pred_fallthru
      _
    %795 = vsyncpa [#allocation3], 1
    %796 = vsyncpa [#allocation6], 1
    %797 = vsyncpa [#allocation4], 1

</llo_original>
